<compile_context>
chip_gen: v6e
topology: v6e:2x2x1
jax: 0.10.0
libtpu: 0.0.40
codegen_flags: <defaults>
</compile_context>

<pallas_src>
import jax
import jax.numpy as jnp
from jax.experimental import pallas as pl
from jax.experimental.pallas import tpu as pltpu


def _renderer_kernel(feat_ref, zbuf_ref, w_ref, b_ref, zstats_ref, out_ref):
    # feat_ref : (1, F, T) VMEM    zbuf_ref : (1, 1, T) VMEM
    # w_ref    : (F, 4)    SMEM    b_ref    : (4,)      SMEM
    # zstats   : (B, 2)    SMEM    [zmin, 1/(zmax-zmin)] per batch
    # out_ref  : (1, 5, T) VMEM    channels = [r, g, b, mask, depth]
    b_idx = pl.program_id(0)

    feat = feat_ref[0]                      # (F, T) lane-dense
    zb = zbuf_ref[0]                        # (1, T) lane-dense
    num_feat = feat.shape[0]

    # --- synthetic shader: per-pixel linear projection to RGB on the VPU ---
    rows = [feat[f:f + 1, :] for f in range(num_feat)]      # each (1, T)
    for c in range(3):
        acc = rows[0] * w_ref[0, c]
        for f in range(1, num_feat):
            acc = acc + rows[f] * w_ref[f, c]
        out_ref[0, c:c + 1, :] = acc + b_ref[c]

    # --- mask = (fragments.zbuf > -1).float() ---
    out_ref[0, 3:4, :] = (zb > -1.0).astype(jnp.float32)

    # --- depth = (z - zmin) * 1/(zmax - zmin)  (per-batch stats from SMEM) ---
    zmin = zstats_ref[b_idx, 0]
    inv_rng = zstats_ref[b_idx, 1]
    out_ref[0, 4:5, :] = (zb - zmin) * inv_rng


def _pick_tile(hw, cap=16384):
    """Largest multiple-of-128 divisor of hw not exceeding cap (or hw itself)."""
    if hw <= cap or hw % 128 != 0:
        return hw
    best = 128
    t = 128
    while t <= cap:
        if hw % t == 0:
            best = t
        t += 128
    return best


def mesh_renderer_with_depth(features, zbuf, shader_w, shader_b):
    """features: (B,H,W,F) f32, zbuf: (B,H,W,1) f32, shader_w: (F,4), shader_b: (1,4) or (4,).

    Returns (B, H, W, 5) f32 = cat([rgb, mask, depth], -1), matching the
    PyTorch forward semantics.
    """
    B, H, W, F = features.shape
    assert zbuf.shape == (B, H, W, 1)
    HW = H * W

    # Channel-first, spatially-flattened layout for lane-dense kernel access.
    feat_cf = jnp.transpose(features, (0, 3, 1, 2)).reshape(B, F, HW)
    zbuf_cf = zbuf.reshape(B, 1, HW)

    # Per-batch depth stats (tiny XLA reduction) -> SMEM scalars.
    # NOTE: matches the original semantics (min includes the -1 background
    # sentinel; zmax == zmin yields NaN exactly like the PyTorch reference).
    zflat = zbuf.reshape(B, -1)
    zmin = zflat.min(axis=-1)
    zmax = zflat.max(axis=-1)
    zstats = jnp.stack([zmin, 1.0 / (zmax - zmin)], axis=-1).astype(jnp.float32)

    w = shader_w.astype(jnp.float32)                # (F, 4); only 3 cols used
    bvec = shader_b.reshape(-1).astype(jnp.float32)  # (4,)

    tile = _pick_tile(HW)
    num_tiles = HW // tile

    grid_spec = pltpu.PrefetchScalarGridSpec(
        num_scalar_prefetch=0,
        grid=(B, num_tiles),
        in_specs=[
            pl.BlockSpec((1, F, tile), lambda b, t: (b, 0, t)),
            pl.BlockSpec((1, 1, tile), lambda b, t: (b, 0, t)),
            pl.BlockSpec(memory_space=pltpu.MemorySpace.SMEM),  # shader_w
            pl.BlockSpec(memory_space=pltpu.MemorySpace.SMEM),  # shader_b
            pl.BlockSpec(memory_space=pltpu.MemorySpace.SMEM),  # zstats
        ],
        out_specs=pl.BlockSpec((1, 5, tile), lambda b, t: (b, 0, t)),
    )

    out_cf = pl.pallas_call(
        _renderer_kernel,
        out_shape=jax.ShapeDtypeStruct((B, 5, HW), jnp.float32),
        grid_spec=grid_spec,
        compiler_params=pltpu.CompilerParams(
            dimension_semantics=("parallel", "parallel"),
        ),
    )(feat_cf, zbuf_cf, w, bvec, zstats)

    # Layout plumbing back to the module's NHWC output.
    return jnp.transpose(out_cf.reshape(B, 5, H, W), (0, 2, 3, 1))


def _reference(features, zbuf, shader_w, shader_b):
    """Pure-JAX reference mirroring the PyTorch forward semantics."""
    images = jnp.matmul(features, shader_w) + shader_b.reshape(1, 1, 1, -1)
    mask = (zbuf > -1.0).astype(jnp.float32)
    B = images.shape[0]
    zflat = zbuf.reshape(B, -1)
    zmin = zflat.min(-1, keepdims=True)
    zmax = zflat.max(-1, keepdims=True)
    depth = (zflat - zmin) / (zmax - zmin)
    depth = depth.reshape(images.shape[0], images.shape[1], images.shape[2], 1)
    return jnp.concatenate([images[..., :3], mask, depth], axis=-1)


if __name__ == "__main__":
    # TODO(synk): the actual PyTorch3D rasterizer (mesh -> fragments.zbuf) is an
    # external module and is not translated; zbuf is synthesized as kernel input.
    B, H, W, F = 2, 16, 16, 4

    key = jax.random.PRNGKey(0)
    k_feat, k_z, k_hit, k_w, k_b = jax.random.split(key, 5)

    features = jax.random.normal(k_feat, (B, H, W, F), dtype=jnp.float32)

    # Synthetic zbuf: background pixels get -1 (miss), hit pixels in [0.5, 3.0).
    hit = jax.random.uniform(k_hit, (B, H, W, 1)) > 0.3
    zvals = 0.5 + 2.5 * jax.random.uniform(k_z, (B, H, W, 1), dtype=jnp.float32)
    zbuf = jnp.where(hit, zvals, jnp.float32(-1.0))

    # Deterministic synthetic shader parameters (per-pixel linear shader F -> RGBA).
    shader_w = (0.1 * jax.random.normal(k_w, (F, 4), dtype=jnp.float32)).astype(jnp.float32)
    shader_b = (0.01 * jax.random.normal(k_b, (1, 4), dtype=jnp.float32)).astype(jnp.float32)

    out = mesh_renderer_with_depth(features, zbuf, shader_w, shader_b)
    out = jax.block_until_ready(out)

    ref = _reference(features, zbuf, shader_w, shader_b)
    assert out.shape == (B, H, W, 5), out.shape
    assert jnp.allclose(out, ref, atol=1e-5, rtol=1e-5), float(jnp.max(jnp.abs(out - ref)))

    print("KERNEL_OK")
</pallas_src>

<mosaic_0001>
module attributes {stable_mosaic.version = 11 : i64} {
  func.func @_renderer_kernel(%arg0: i32, %arg1: i32, %arg2: memref<1x4x256xf32, #tpu.memory_space<vmem>>, %arg3: memref<1x1x256xf32, #tpu.memory_space<vmem>>, %arg4: memref<4x4xf32, #tpu.memory_space<smem>>, %arg5: memref<4xf32, #tpu.memory_space<smem>>, %arg6: memref<2x2xf32, #tpu.memory_space<smem>>, %arg7: memref<1x5x256xf32, #tpu.memory_space<vmem>>) attributes {dimension_semantics = [#tpu.dimension_semantics<parallel>, #tpu.dimension_semantics<parallel>], iteration_bounds = array<i64: 2, 1>, scalar_prefetch = 0 : i64, scratch_operands = 0 : i64, tpu.core_type = #tpu.core_type<tc>, window_params = [{transform_indices = @transform_0, window_bounds = array<i64: 1, 4, 256>}, {transform_indices = @transform_1, window_bounds = array<i64: 1, 1, 256>}, {transform_indices = @transform_2, window_bounds = array<i64: 4, 4>}, {transform_indices = @transform_3, window_bounds = array<i64: 4>}, {transform_indices = @transform_4, window_bounds = array<i64: 2, 2>}, {transform_indices = @transform_5, window_bounds = array<i64: 1, 5, 256>}]} {
    %c0 = arith.constant 0 : index
    %c0_0 = arith.constant 0 : index
    %c0_1 = arith.constant 0 : index
    %0 = vector.load %arg2[%c0, %c0_0, %c0_1] : memref<1x4x256xf32, #tpu.memory_space<vmem>>, vector<1x4x256xf32>
    %1 = vector.shape_cast %0 : vector<1x4x256xf32> to vector<4x256xf32>
    %c0_2 = arith.constant 0 : index
    %c0_3 = arith.constant 0 : index
    %c0_4 = arith.constant 0 : index
    %2 = vector.load %arg3[%c0_2, %c0_3, %c0_4] : memref<1x1x256xf32, #tpu.memory_space<vmem>>, vector<1x1x256xf32>
    %3 = vector.shape_cast %2 : vector<1x1x256xf32> to vector<1x256xf32>
    %4 = vector.extract_strided_slice %1 {offsets = [0, 0], sizes = [1, 256], strides = [1, 1]} : vector<4x256xf32> to vector<1x256xf32>
    %5 = vector.extract_strided_slice %1 {offsets = [1, 0], sizes = [1, 256], strides = [1, 1]} : vector<4x256xf32> to vector<1x256xf32>
    %6 = vector.extract_strided_slice %1 {offsets = [2, 0], sizes = [1, 256], strides = [1, 1]} : vector<4x256xf32> to vector<1x256xf32>
    %7 = vector.extract_strided_slice %1 {offsets = [3, 0], sizes = [1, 256], strides = [1, 1]} : vector<4x256xf32> to vector<1x256xf32>
    %c0_5 = arith.constant 0 : index
    %c0_6 = arith.constant 0 : index
    %8 = memref.load %arg4[%c0_5, %c0_6] : memref<4x4xf32, #tpu.memory_space<smem>>
    %9 = vector.broadcast %8 : f32 to vector<1x256xf32>
    %10 = arith.mulf %4, %9 : vector<1x256xf32>
    %c1 = arith.constant 1 : index
    %c0_7 = arith.constant 0 : index
    %11 = memref.load %arg4[%c1, %c0_7] : memref<4x4xf32, #tpu.memory_space<smem>>
    %12 = vector.broadcast %11 : f32 to vector<1x256xf32>
    %13 = arith.mulf %5, %12 : vector<1x256xf32>
    %14 = arith.addf %10, %13 : vector<1x256xf32>
    %c2 = arith.constant 2 : index
    %c0_8 = arith.constant 0 : index
    %15 = memref.load %arg4[%c2, %c0_8] : memref<4x4xf32, #tpu.memory_space<smem>>
    %16 = vector.broadcast %15 : f32 to vector<1x256xf32>
    %17 = arith.mulf %6, %16 : vector<1x256xf32>
    %18 = arith.addf %14, %17 : vector<1x256xf32>
    %c3 = arith.constant 3 : index
    %c0_9 = arith.constant 0 : index
    %19 = memref.load %arg4[%c3, %c0_9] : memref<4x4xf32, #tpu.memory_space<smem>>
    %20 = vector.broadcast %19 : f32 to vector<1x256xf32>
    %21 = arith.mulf %7, %20 : vector<1x256xf32>
    %22 = arith.addf %18, %21 : vector<1x256xf32>
    %c0_10 = arith.constant 0 : index
    %23 = memref.load %arg5[%c0_10] : memref<4xf32, #tpu.memory_space<smem>>
    %24 = vector.broadcast %23 : f32 to vector<1x256xf32>
    %25 = arith.addf %22, %24 : vector<1x256xf32>
    %c0_11 = arith.constant 0 : index
    %c0_12 = arith.constant 0 : index
    %c0_13 = arith.constant 0 : index
    %26 = vector.load %arg7[%c0_11, %c0_12, %c0_13] : memref<1x5x256xf32, #tpu.memory_space<vmem>>, vector<1x1x256xf32>
    %27 = vector.shape_cast %26 : vector<1x1x256xf32> to vector<1x256xf32>
    %28 = vector.shape_cast %25 : vector<1x256xf32> to vector<1x1x256xf32>
    tpu.vector_store %arg7[%c0_11, %c0_12, %c0_13], %28 {strides = array<i32>} : memref<1x5x256xf32, #tpu.memory_space<vmem>>, vector<1x1x256xf32>,
    %c0_14 = arith.constant 0 : index
    %c1_15 = arith.constant 1 : index
    %29 = memref.load %arg4[%c0_14, %c1_15] : memref<4x4xf32, #tpu.memory_space<smem>>
    %30 = vector.broadcast %29 : f32 to vector<1x256xf32>
    %31 = arith.mulf %4, %30 : vector<1x256xf32>
    %c1_16 = arith.constant 1 : index
    %c1_17 = arith.constant 1 : index
    %32 = memref.load %arg4[%c1_16, %c1_17] : memref<4x4xf32, #tpu.memory_space<smem>>
    %33 = vector.broadcast %32 : f32 to vector<1x256xf32>
    %34 = arith.mulf %5, %33 : vector<1x256xf32>
    %35 = arith.addf %31, %34 : vector<1x256xf32>
    %c2_18 = arith.constant 2 : index
    %c1_19 = arith.constant 1 : index
    %36 = memref.load %arg4[%c2_18, %c1_19] : memref<4x4xf32, #tpu.memory_space<smem>>
    %37 = vector.broadcast %36 : f32 to vector<1x256xf32>
    %38 = arith.mulf %6, %37 : vector<1x256xf32>
    %39 = arith.addf %35, %38 : vector<1x256xf32>
    %c3_20 = arith.constant 3 : index
    %c1_21 = arith.constant 1 : index
    %40 = memref.load %arg4[%c3_20, %c1_21] : memref<4x4xf32, #tpu.memory_space<smem>>
    %41 = vector.broadcast %40 : f32 to vector<1x256xf32>
    %42 = arith.mulf %7, %41 : vector<1x256xf32>
    %43 = arith.addf %39, %42 : vector<1x256xf32>
    %c1_22 = arith.constant 1 : index
    %44 = memref.load %arg5[%c1_22] : memref<4xf32, #tpu.memory_space<smem>>
    %45 = vector.broadcast %44 : f32 to vector<1x256xf32>
    %46 = arith.addf %43, %45 : vector<1x256xf32>
    %c0_23 = arith.constant 0 : index
    %c1_24 = arith.constant 1 : index
    %c0_25 = arith.constant 0 : index
    %47 = vector.load %arg7[%c0_23, %c1_24, %c0_25] : memref<1x5x256xf32, #tpu.memory_space<vmem>>, vector<1x1x256xf32>
    %48 = vector.shape_cast %47 : vector<1x1x256xf32> to vector<1x256xf32>
    %49 = vector.shape_cast %46 : vector<1x256xf32> to vector<1x1x256xf32>
    tpu.vector_store %arg7[%c0_23, %c1_24, %c0_25], %49 {strides = array<i32>} : memref<1x5x256xf32, #tpu.memory_space<vmem>>, vector<1x1x256xf32>,
    %c0_26 = arith.constant 0 : index
    %c2_27 = arith.constant 2 : index
    %50 = memref.load %arg4[%c0_26, %c2_27] : memref<4x4xf32, #tpu.memory_space<smem>>
    %51 = vector.broadcast %50 : f32 to vector<1x256xf32>
    %52 = arith.mulf %4, %51 : vector<1x256xf32>
    %c1_28 = arith.constant 1 : index
    %c2_29 = arith.constant 2 : index
    %53 = memref.load %arg4[%c1_28, %c2_29] : memref<4x4xf32, #tpu.memory_space<smem>>
    %54 = vector.broadcast %53 : f32 to vector<1x256xf32>
    %55 = arith.mulf %5, %54 : vector<1x256xf32>
    %56 = arith.addf %52, %55 : vector<1x256xf32>
    %c2_30 = arith.constant 2 : index
    %c2_31 = arith.constant 2 : index
    %57 = memref.load %arg4[%c2_30, %c2_31] : memref<4x4xf32, #tpu.memory_space<smem>>
    %58 = vector.broadcast %57 : f32 to vector<1x256xf32>
    %59 = arith.mulf %6, %58 : vector<1x256xf32>
    %60 = arith.addf %56, %59 : vector<1x256xf32>
    %c3_32 = arith.constant 3 : index
    %c2_33 = arith.constant 2 : index
    %61 = memref.load %arg4[%c3_32, %c2_33] : memref<4x4xf32, #tpu.memory_space<smem>>
    %62 = vector.broadcast %61 : f32 to vector<1x256xf32>
    %63 = arith.mulf %7, %62 : vector<1x256xf32>
    %64 = arith.addf %60, %63 : vector<1x256xf32>
    %c2_34 = arith.constant 2 : index
    %65 = memref.load %arg5[%c2_34] : memref<4xf32, #tpu.memory_space<smem>>
    %66 = vector.broadcast %65 : f32 to vector<1x256xf32>
    %67 = arith.addf %64, %66 : vector<1x256xf32>
    %c0_35 = arith.constant 0 : index
    %c2_36 = arith.constant 2 : index
    %c0_37 = arith.constant 0 : index
    %68 = vector.load %arg7[%c0_35, %c2_36, %c0_37] : memref<1x5x256xf32, #tpu.memory_space<vmem>>, vector<1x1x256xf32>
    %69 = vector.shape_cast %68 : vector<1x1x256xf32> to vector<1x256xf32>
    %70 = vector.shape_cast %67 : vector<1x256xf32> to vector<1x1x256xf32>
    tpu.vector_store %arg7[%c0_35, %c2_36, %c0_37], %70 {strides = array<i32>} : memref<1x5x256xf32, #tpu.memory_space<vmem>>, vector<1x1x256xf32>,
    %cst = arith.constant -1.000000e+00 : f32
    %71 = vector.broadcast %cst : f32 to vector<1x256xf32>
    %72 = arith.cmpf ogt, %3, %71 : vector<1x256xf32>
    %73 = arith.extui %72 : vector<1x256xi1> to vector<1x256xi32>
    %74 = arith.sitofp %73 : vector<1x256xi32> to vector<1x256xf32>
    %c0_38 = arith.constant 0 : index
    %c3_39 = arith.constant 3 : index
    %c0_40 = arith.constant 0 : index
    %75 = vector.load %arg7[%c0_38, %c3_39, %c0_40] : memref<1x5x256xf32, #tpu.memory_space<vmem>>, vector<1x1x256xf32>
    %76 = vector.shape_cast %75 : vector<1x1x256xf32> to vector<1x256xf32>
    %77 = vector.shape_cast %74 : vector<1x256xf32> to vector<1x1x256xf32>
    tpu.vector_store %arg7[%c0_38, %c3_39, %c0_40], %77 {strides = array<i32>} : memref<1x5x256xf32, #tpu.memory_space<vmem>>, vector<1x1x256xf32>,
    %78 = arith.index_cast %arg0 : i32 to index
    %c0_41 = arith.constant 0 : index
    %79 = memref.load %arg6[%78, %c0_41] : memref<2x2xf32, #tpu.memory_space<smem>>
    %80 = arith.index_cast %arg0 : i32 to index
    %c1_42 = arith.constant 1 : index
    %81 = memref.load %arg6[%80, %c1_42] : memref<2x2xf32, #tpu.memory_space<smem>>
    %82 = vector.broadcast %79 : f32 to vector<1x256xf32>
    %83 = arith.subf %3, %82 : vector<1x256xf32>
    %84 = vector.broadcast %81 : f32 to vector<1x256xf32>
    %85 = arith.mulf %83, %84 : vector<1x256xf32>
    %c0_43 = arith.constant 0 : index
    %c4 = arith.constant 4 : index
    %c0_44 = arith.constant 0 : index
    %86 = vector.load %arg7[%c0_43, %c4, %c0_44] : memref<1x5x256xf32, #tpu.memory_space<vmem>>, vector<1x1x256xf32>
    %87 = vector.shape_cast %86 : vector<1x1x256xf32> to vector<1x256xf32>
    %88 = vector.shape_cast %85 : vector<1x256xf32> to vector<1x1x256xf32>
    tpu.vector_store %arg7[%c0_43, %c4, %c0_44], %88 {strides = array<i32>} : memref<1x5x256xf32, #tpu.memory_space<vmem>>, vector<1x1x256xf32>,
    return
  }
  func.func @transform_0(%arg0: i32, %arg1: i32) -> (i32, i32, i32) {
    %c0_i32 = arith.constant 0 : i32
    %c0_i32_0 = arith.constant 0 : i32
    return %arg0, %c0_i32, %arg1 : i32, i32, i32
  }
  func.func @transform_1(%arg0: i32, %arg1: i32) -> (i32, i32, i32) {
    %c0_i32 = arith.constant 0 : i32
    %c0_i32_0 = arith.constant 0 : i32
    return %arg0, %c0_i32, %arg1 : i32, i32, i32
  }
  func.func @transform_2(%arg0: i32, %arg1: i32) -> (i32, i32) {
    %c0_i32 = arith.constant 0 : i32
    %c0_i32_0 = arith.constant 0 : i32
    %c0_i32_1 = arith.constant 0 : i32
    return %c0_i32, %c0_i32_0 : i32, i32
  }
  func.func @transform_3(%arg0: i32, %arg1: i32) -> i32 {
    %c0_i32 = arith.constant 0 : i32
    %c0_i32_0 = arith.constant 0 : i32
    return %c0_i32 : i32
  }
  func.func @transform_4(%arg0: i32, %arg1: i32) -> (i32, i32) {
    %c0_i32 = arith.constant 0 : i32
    %c0_i32_0 = arith.constant 0 : i32
    %c0_i32_1 = arith.constant 0 : i32
    return %c0_i32, %c0_i32_0 : i32, i32
  }
  func.func @transform_5(%arg0: i32, %arg1: i32) -> (i32, i32, i32) {
    %c0_i32 = arith.constant 0 : i32
    %c0_i32_0 = arith.constant 0 : i32
    return %arg0, %c0_i32, %arg1 : i32, i32, i32
  }
}

</mosaic_0001>

<llo_original>
// kernel: tpu_custom_call.1
$region0: #{tpu_custom_call.1}
  #allocation0 [shape = 'u32[]', space=smem, size = 0x4, offset = 0x4, fixed_abs, tag = 'smem constant byte address 0x4 - core index']
  #allocation1 [shape = 'u32[144,128]{1,0:T(1,128)}', space=vmem, size = 0x12000, scoped, tag = 'internal scratch']
  %s0 = inlined_call_operand.hbm [shape: f32[2,4,256], index: 0, kind: input, shape index: {}]
  %s1 = inlined_call_operand.hbm [shape: f32[2,1,256], index: 1, kind: input, shape index: {}]
  %s2 = inlined_call_operand.hbm [shape: f32[4,4], index: 2, kind: input, shape index: {}]
  %s3 = inlined_call_operand.vmem [shape: f32[4], index: 3, kind: input, shape index: {}]
  %s4 = inlined_call_operand.vmem [shape: f32[2,2], index: 4, kind: input, shape index: {}]
  %s5 = inlined_call_operand.vmem [shape: f32[2,5,256], index: 5, kind: output, shape index: {}]
  %s6 = sld [smem:[#allocation0]]
  $region73: #{tpu_custom_call.1} parent=0
    _
  %s8 = ssub.s32 1, %s6
  %s9 = scalar_select 0, %s8, %s6
  $region1: #{tpu_custom_call.1} parent=0
    #allocation2 [shape = 'u8[8192]{0}', space=vmem, size = 0x2000, scoped, tag = 'input window, operand 0']
    #allocation3 [shape = 's32[2]{0}', space=sflag, size = 0x8, scoped, tag = 'scoped memory for tpu_custom_call.1']
    #allocation4 [shape = 's32[2]{0}', space=sflag, size = 0x8, scoped, tag = 'scoped memory for tpu_custom_call.1']
    #allocation5 [shape = 's32[2]{0}', space=sflag, size = 0x8, scoped, tag = 'scoped memory for tpu_custom_call.1']
    #allocation6 [shape = 'u8[2048]{0}', space=vmem, size = 0x800, scoped, tag = 'input window, operand 1']
    #allocation7 [shape = 's32[2]{0}', space=sflag, size = 0x8, scoped, tag = 'scoped memory for tpu_custom_call.1']
    #allocation8 [shape = 'u8[2048]{0}', space=smem, size = 0x800, scoped, tag = 'input window, operand 2, single buffered']
    #allocation9 [shape = 'u8[512]{0}', space=smem, size = 0x200, scoped, tag = 'input window, operand 3, single buffered']
    #allocation10 [shape = 'u8[1024]{0}', space=smem, size = 0x400, scoped, tag = 'input window, operand 4, single buffered']
    #allocation11 [shape = 's32[1]{0}', space=sflag, size = 0x4, scoped, tag = 'scoped memory for tpu_custom_call.1']
    %10 = vsyncpa [#allocation3], 0
    %s11 = scalar_lea.sflag [#allocation3], 1
    %12 = vsyncpa %s11, 0
    %13 = vsyncpa [#allocation7], 0
    %s14 = scalar_lea.sflag [#allocation7], 1
    %15 = vsyncpa %s14, 0
    %16 = vsyncpa [#allocation4], 0
    %17 = vsyncpa [#allocation5], 0
    %18 = vsyncpa [#allocation11], 0
    loop: start=0, step=1, limit=4
    $region2: #{tpu_custom_call.1} parent=1 // loop_pre_header
      _
    $region3: #{tpu_custom_call.1} parent=1 // loop_header
      %s20 = sphi 0, %s24
      %p21 = scmp.ge.s32.totalorder %s20, 4
      %s27 = sphi 0, %s39
      %s28 = sphi 0, %s35
      %s29 = sphi 0, %s27
      %s30 = sphi 0, %s28
      %s31 = sphi 0, %s29
      %s32 = sphi 0, %s30
      %s44 = sphi 0, %s46
      %s47 = sphi 0, %s44
      %s48 = sphi 0, %s47
      %s64 = sphi 0, %s48
      %s72 = sphi 0, %s74
      %s75 = sphi 0, %s72
      %s76 = sphi 0, %s75
      %s92 = sphi 0, %s76
      %s96 = sphi 0, %s96
      %s98 = sphi 0, %s96
      %s99 = sphi 0, %s98
      %s113 = sphi 0, %s99
      %s117 = sphi 0, %s117
      %s119 = sphi 0, %s117
      %s120 = sphi 0, %s119
      %s134 = sphi 0, %s120
      %s138 = sphi 0, %s138
      %s140 = sphi 0, %s138
      %s141 = sphi 0, %s140
      %s155 = sphi 0, %s141
      %s163 = sphi 0, %s165
      %s166 = sphi 0, %s163
      %s167 = sphi 0, %s166
      %s183 = sphi 0, %s167
    $region4: #{tpu_custom_call.1} parent=1 // loop_header_branch
      %23 = sbr.rel (%p21) target = $region8
    $region5: #{tpu_custom_call.1} parent=1 // loop_body
      %s25 = ssub.s32 %s20, 1
      %s26 = ssub.s32 %s20, 2
      %s33 = sadd.s32 1, %s28
      %p34 = scmp.ge.s32.totalorder %s33, 1
      %s35 = scalar_select %p34, 0, %s33
      %s36 = sadd.s32 1, %s27
      %s37 = scalar_select %p34, %s36, %s27
      %p38 = scmp.ge.s32.totalorder %s37, 2
      %s39 = scalar_select %p38, 0, %s37
      %s40 = ssub.s32 %s27, %s39
      %s41 = ssub.s32 %s28, %s35
      %s42 = sor.u32 %s40, %s41
      %p43 = scmp.eq.s32.totalorder %s42, 0
      %s45 = sadd.s32 %s44, 1
      %s46 = scalar_select %p43, %s44, %s45
      %p49 = pneg %p43
      %p50 = scmp.eq.s32.totalorder %s20, 1
      %p51 = por %p49, %p50
      %p52 = scmp.ne.s32.totalorder %s44, %s47
      %p53 = scmp.eq.s32.totalorder %s20, 0
      %p54 = por %p52, %p53
      %p55 = scmp.ne.s32.totalorder %s44, %s47
      %p56 = scmp.eq.s32.totalorder %s25, 1
      %p57 = por %p55, %p56
      %p58 = scmp.ne.s32.totalorder %s47, %s48
      %p59 = scmp.eq.s32.totalorder %s25, 0
      %p60 = por %p58, %p59
      %p61 = scmp.ne.s32.totalorder %s47, %s48
      %p62 = scmp.eq.s32.totalorder %s26, 1
      %p63 = por %p61, %p62
      %p65 = scmp.ne.s32.totalorder %s48, %s64
      %p66 = scmp.eq.s32.totalorder %s26, 0
      %p67 = por %p65, %p66
      %s68 = ssub.s32 %s27, %s39
      %s69 = ssub.s32 %s28, %s35
      %s70 = sor.u32 %s68, %s69
      %p71 = scmp.eq.s32.totalorder %s70, 0
      %s73 = sadd.s32 %s72, 1
      %s74 = scalar_select %p71, %s72, %s73
      %p77 = pneg %p71
      %p78 = scmp.eq.s32.totalorder %s20, 1
      %p79 = por %p77, %p78
      %p80 = scmp.ne.s32.totalorder %s72, %s75
      %p81 = scmp.eq.s32.totalorder %s20, 0
      %p82 = por %p80, %p81
      %p83 = scmp.ne.s32.totalorder %s72, %s75
      %p84 = scmp.eq.s32.totalorder %s25, 1
      %p85 = por %p83, %p84
      %p86 = scmp.ne.s32.totalorder %s75, %s76
      %p87 = scmp.eq.s32.totalorder %s25, 0
      %p88 = por %p86, %p87
      %p89 = scmp.ne.s32.totalorder %s75, %s76
      %p90 = scmp.eq.s32.totalorder %s26, 1
      %p91 = por %p89, %p90
      %p93 = scmp.ne.s32.totalorder %s76, %s92
      %p94 = scmp.eq.s32.totalorder %s26, 0
      %p95 = por %p93, %p94
      %s97 = sadd.s32 %s96, 1
      %p100 = scmp.eq.s32.totalorder %s20, 1
      %p101 = scmp.ne.s32.totalorder %s96, %s98
      %p102 = scmp.eq.s32.totalorder %s20, 0
      %p103 = por %p101, %p102
      %p104 = scmp.ne.s32.totalorder %s96, %s98
      %p105 = scmp.eq.s32.totalorder %s25, 1
      %p106 = por %p104, %p105
      %p107 = scmp.ne.s32.totalorder %s98, %s99
      %p108 = scmp.eq.s32.totalorder %s25, 0
      %p109 = por %p107, %p108
      %p110 = scmp.ne.s32.totalorder %s98, %s99
      %p111 = scmp.eq.s32.totalorder %s26, 1
      %p112 = por %p110, %p111
      %p114 = scmp.ne.s32.totalorder %s99, %s113
      %p115 = scmp.eq.s32.totalorder %s26, 0
      %p116 = por %p114, %p115
      %s118 = sadd.s32 %s117, 1
      %p121 = scmp.eq.s32.totalorder %s20, 1
      %p122 = scmp.ne.s32.totalorder %s117, %s119
      %p123 = scmp.eq.s32.totalorder %s20, 0
      %p124 = por %p122, %p123
      %p125 = scmp.ne.s32.totalorder %s117, %s119
      %p126 = scmp.eq.s32.totalorder %s25, 1
      %p127 = por %p125, %p126
      %p128 = scmp.ne.s32.totalorder %s119, %s120
      %p129 = scmp.eq.s32.totalorder %s25, 0
      %p130 = por %p128, %p129
      %p131 = scmp.ne.s32.totalorder %s119, %s120
      %p132 = scmp.eq.s32.totalorder %s26, 1
      %p133 = por %p131, %p132
      %p135 = scmp.ne.s32.totalorder %s120, %s134
      %p136 = scmp.eq.s32.totalorder %s26, 0
      %p137 = por %p135, %p136
      %s139 = sadd.s32 %s138, 1
      %p142 = scmp.eq.s32.totalorder %s20, 1
      %p143 = scmp.ne.s32.totalorder %s138, %s140
      %p144 = scmp.eq.s32.totalorder %s20, 0
      %p145 = por %p143, %p144
      %p146 = scmp.ne.s32.totalorder %s138, %s140
      %p147 = scmp.eq.s32.totalorder %s25, 1
      %p148 = por %p146, %p147
      %p149 = scmp.ne.s32.totalorder %s140, %s141
      %p150 = scmp.eq.s32.totalorder %s25, 0
      %p151 = por %p149, %p150
      %p152 = scmp.ne.s32.totalorder %s140, %s141
      %p153 = scmp.eq.s32.totalorder %s26, 1
      %p154 = por %p152, %p153
      %p156 = scmp.ne.s32.totalorder %s141, %s155
      %p157 = scmp.eq.s32.totalorder %s26, 0
      %p158 = por %p156, %p157
      %s159 = ssub.s32 %s27, %s39
      %s160 = ssub.s32 %s28, %s35
      %s161 = sor.u32 %s159, %s160
      %p162 = scmp.eq.s32.totalorder %s161, 0
      %s164 = sadd.s32 %s163, 1
      %s165 = scalar_select %p162, %s163, %s164
      %p168 = pneg %p162
      %p169 = scmp.eq.s32.totalorder %s20, 1
      %p170 = por %p168, %p169
      %p171 = scmp.ne.s32.totalorder %s163, %s166
      %p172 = scmp.eq.s32.totalorder %s20, 0
      %p173 = por %p171, %p172
      %p174 = scmp.ne.s32.totalorder %s163, %s166
      %p175 = scmp.eq.s32.totalorder %s25, 1
      %p176 = por %p174, %p175
      %p177 = scmp.ne.s32.totalorder %s166, %s167
      %p178 = scmp.eq.s32.totalorder %s25, 0
      %p179 = por %p177, %p178
      %p180 = scmp.ne.s32.totalorder %s166, %s167
      %p181 = scmp.eq.s32.totalorder %s26, 1
      %p182 = por %p180, %p181
      %p184 = scmp.ne.s32.totalorder %s167, %s183
      %p185 = scmp.eq.s32.totalorder %s26, 0
      %p186 = por %p184, %p185
      %p187 = scmp.le.s32.totalorder 1, %s20
      %p188 = scmp.lt.s32.totalorder %s20, 3
      %p189 = pnand %p187, %p188
      %p190 = pneg %p189
      // Predicated region
      $region9: #{tpu_custom_call.1} parent=5 // pred_check
        _
      $region10: #{tpu_custom_call.1} parent=5 // pred_check_branch
        %192 = sbr.rel (%p189) target = $region12
      $region11: #{tpu_custom_call.1} parent=5 // pred_region
        %s193 = ssub.s32 %s20, 1
        // Predicated region
        $region13: #{tpu_custom_call.1} parent=11 // pred_check
          %p194 = pneg %p109
        $region14: #{tpu_custom_call.1} parent=11 // pred_check_branch
          %196 = sbr.rel (%p194) target = $region16
        $region15: #{tpu_custom_call.1} parent=11 // pred_region
          %s198 = ssub.s32 64, 64
          %199 = vsyncadd [#allocation4], %s198
          %202 = dma.hbm_to_smem %s2, 64, [#allocation8], [#allocation4]
        $region16: #{tpu_custom_call.1} parent=11 // pred_fallthru
          _
        // Predicated region
        $region17: #{tpu_custom_call.1} parent=11 // pred_check
          %p203 = pneg %p130
        $region18: #{tpu_custom_call.1} parent=11 // pred_check_branch
          %205 = sbr.rel (%p203) target = $region20
        $region19: #{tpu_custom_call.1} parent=11 // pred_region
          %s207 = ssub.s32 16, 16
          %208 = vsyncadd [#allocation5], %s207
          %s210 = sshll.u32 %s3, 4
          %s211 = int_to_ptr.vmem [resolvable:$true] %s210
          %213 = dma.vmem_to_smem %s211, 16, [#allocation9], [#allocation5]
        $region20: #{tpu_custom_call.1} parent=11 // pred_fallthru
          _
        // Predicated region
        $region21: #{tpu_custom_call.1} parent=11 // pred_check
          %p214 = pneg %p151
        $region22: #{tpu_custom_call.1} parent=11 // pred_check_branch
          %216 = sbr.rel (%p214) target = $region24
        $region23: #{tpu_custom_call.1} parent=11 // pred_region
          %s218 = ssub.s32 32, 32
          %219 = vsyncadd [#allocation11], %s218
          %s221 = sshll.u32 %s4, 4
          %s222 = int_to_ptr.vmem [resolvable:$true] %s221
          %224 = dma.vmem_to_smem %s222, 32, [#allocation10], [#allocation11]
        $region24: #{tpu_custom_call.1} parent=11 // pred_fallthru
          _
      $region12: #{tpu_custom_call.1} parent=5 // pred_fallthru
        _
      %p225 = scmp.lt.s32.totalorder %s20, 2
      // Predicated region
      $region25: #{tpu_custom_call.1} parent=5 // pred_check
        %p226 = pneg %p225
      $region26: #{tpu_custom_call.1} parent=5 // pred_check_branch
        %228 = sbr.rel (%p226) target = $region28
      $region27: #{tpu_custom_call.1} parent=5 // pred_region
        // Predicated region
        $region29: #{tpu_custom_call.1} parent=27 // pred_check
          %p229 = pneg %p54
        $region30: #{tpu_custom_call.1} parent=27 // pred_check_branch
          %231 = sbr.rel (%p229) target = $region32
        $region31: #{tpu_custom_call.1} parent=27 // pred_region
          %s232 = sand.u32 %s44, 1
          %s233 = scalar_lea.sflag [#allocation3], %s232
          %s234 = sand.u32 %s44, 1
          %s235 = smul.addr %s234, 8
          %s236 = scalar_lea.vmem [#allocation2], %s235
          %s237 = smul.u32 2, %s28
          %s239 = ssub.s32 128, 128
          %240 = vsyncadd %s233, %s239
          %s241 = smul.addr %s27, 2
          %s242 = sadd.s32 %s237, %s241
          %s243 = smul.addr %s242, 64
          %s244 = scalar_lea.hbm %s0, %s243
          %s246 = sshll.u32 %s236, 4
          %s247 = int_to_ptr.vmem [resolvable:$true] %s246
          %249 = dma.hbm_to_vmem [thread:$0]  %s244, 128, %s247, %s233
        $region32: #{tpu_custom_call.1} parent=27 // pred_fallthru
          _
        // Predicated region
        $region33: #{tpu_custom_call.1} parent=27 // pred_check
          %p250 = pneg %p82
        $region34: #{tpu_custom_call.1} parent=27 // pred_check_branch
          %252 = sbr.rel (%p250) target = $region36
        $region35: #{tpu_custom_call.1} parent=27 // pred_region
          %s253 = sand.u32 %s72, 1
          %s254 = scalar_lea.sflag [#allocation7], %s253
          %s255 = sand.u32 %s72, 1
          %s256 = smul.addr %s255, 2
          %s257 = scalar_lea.vmem [#allocation6], %s256
          %s258 = smul.u32 2, %s28
          %s260 = ssub.s32 32, 32
          %261 = vsyncadd %s254, %s260
          %s262 = smul.addr %s27, 2
          %s263 = sadd.s32 %s258, %s262
          %s264 = smul.addr %s263, 16
          %s265 = scalar_lea.hbm %s1, %s264
          %s267 = sshll.u32 %s257, 4
          %s268 = int_to_ptr.vmem [resolvable:$true] %s267
          %270 = dma.hbm_to_vmem [thread:$0]  %s265, 32, %s268, %s254
        $region36: #{tpu_custom_call.1} parent=27 // pred_fallthru
          _
      $region28: #{tpu_custom_call.1} parent=5 // pred_fallthru
        _
      %p271 = scmp.le.s32.totalorder 1, %s20
      %p272 = scmp.lt.s32.totalorder %s20, 3
      %p273 = pnand %p271, %p272
      %p274 = pneg %p273
      // Predicated region
      $region37: #{tpu_custom_call.1} parent=5 // pred_check
        _
      $region38: #{tpu_custom_call.1} parent=5 // pred_check_branch
        %276 = sbr.rel (%p273) target = $region40
      $region39: #{tpu_custom_call.1} parent=5 // pred_region
        %s277 = ssub.s32 %s20, 1
        %s278 = sand.u32 %s47, 1
        %s279 = scalar_lea.sflag [#allocation3], %s278
        %s280 = sand.u32 %s47, 1
        %s281 = smul.addr %s280, 8
        %s282 = scalar_lea.vmem [#allocation2], %s281
        // Predicated region
        $region41: #{tpu_custom_call.1} parent=39 // pred_check
          %p283 = pneg %p60
        $region42: #{tpu_custom_call.1} parent=39 // pred_check_branch
          %285 = sbr.rel (%p283) target = $region44
        $region43: #{tpu_custom_call.1} parent=39 // pred_region
          %286 = dma.done %s279, 128
        $region44: #{tpu_custom_call.1} parent=39 // pred_fallthru
          _
        %s287 = sand.u32 %s75, 1
        %s288 = scalar_lea.sflag [#allocation7], %s287
        %s289 = sand.u32 %s75, 1
        %s290 = smul.addr %s289, 2
        %s291 = scalar_lea.vmem [#allocation6], %s290
        // Predicated region
        $region45: #{tpu_custom_call.1} parent=39 // pred_check
          %p292 = pneg %p88
        $region46: #{tpu_custom_call.1} parent=39 // pred_check_branch
          %294 = sbr.rel (%p292) target = $region48
        $region47: #{tpu_custom_call.1} parent=39 // pred_region
          %295 = dma.done %s288, 32
        $region48: #{tpu_custom_call.1} parent=39 // pred_fallthru
          _
        // Predicated region
        $region49: #{tpu_custom_call.1} parent=39 // pred_check
          %p296 = pneg %p109
        $region50: #{tpu_custom_call.1} parent=39 // pred_check_branch
          %298 = sbr.rel (%p296) target = $region52
        $region51: #{tpu_custom_call.1} parent=39 // pred_region
          %299 = dma.done [#allocation4], 64
        $region52: #{tpu_custom_call.1} parent=39 // pred_fallthru
          _
        // Predicated region
        $region53: #{tpu_custom_call.1} parent=39 // pred_check
          %p300 = pneg %p130
        $region54: #{tpu_custom_call.1} parent=39 // pred_check_branch
          %302 = sbr.rel (%p300) target = $region56
        $region55: #{tpu_custom_call.1} parent=39 // pred_region
          %303 = dma.done [#allocation5], 16
        $region56: #{tpu_custom_call.1} parent=39 // pred_fallthru
          _
        // Predicated region
        $region57: #{tpu_custom_call.1} parent=39 // pred_check
          %p304 = pneg %p151
        $region58: #{tpu_custom_call.1} parent=39 // pred_check_branch
          %306 = sbr.rel (%p304) target = $region60
        $region59: #{tpu_custom_call.1} parent=39 // pred_region
          %307 = dma.done [#allocation11], 32
        $region60: #{tpu_custom_call.1} parent=39 // pred_fallthru
          _
        %308 = sfence
        %s309 = sand.u32 %s47, 1
        %s310 = scalar_lea.sflag [#allocation3], %s309
        %s311 = sand.u32 %s47, 1
        %s312 = smul.addr %s311, 8
        %s313 = scalar_lea.vmem [#allocation2], %s312
        %p314 = pneg %p60
        %p315 = pneg %p57
        %s316 = sand.u32 %s75, 1
        %s317 = scalar_lea.sflag [#allocation7], %s316
        %s318 = sand.u32 %s75, 1
        %s319 = smul.addr %s318, 2
        %s320 = scalar_lea.vmem [#allocation6], %s319
        %p321 = pneg %p88
        %p322 = pneg %p85
        %p323 = pneg %p109
        %p324 = pneg %p106
        %p325 = pneg %p130
        %p326 = pneg %p127
        %p327 = pneg %p151
        %p328 = pneg %p148
        %p329 = pneg %p179
        %p330 = pneg %p176
        %s331 = smul.u32 2, %s30
        %p332 = scmp.lt.s32.totalorder %s29, 1
        %s333 = scalar_select %p332, %s29, 1
        %p334 = scmp.lt.s32.totalorder %s331, 1
        %s335 = scalar_select %p334, %s331, 1
        %s336 = smul.addr %s333, 2
        %s337 = sadd.s32 %s335, %s336
        %s338 = smul.addr %s337, 8
        %s339 = scalar_lea.vmem %s5, %s338
        %s340 = smul.u32 2, %s30
        %s341 = smul.u32 2, %s30
        %s342 = smul.u32 2, %s30
        %p343 = scmp.lt.s32.totalorder %s29, 1
        %s344 = scalar_select %p343, %s29, 1
        %p345 = scmp.lt.s32.totalorder %s342, 1
        %s346 = scalar_select %p345, %s342, 1
        %s347 = smul.addr %s344, 2
        %s348 = sadd.s32 %s346, %s347
        %s349 = smul.addr %s348, 8
        %s350 = scalar_lea.vmem %s5, %s349
        %s351 = smul.u32 2, %s30
        %v352 = vld [vmem:[%s282] sm:$0xff]
        %v353 = vld [vmem:[%s291] sm:$0x3]
        %s354 = sld [smem:[#allocation8]]
        %v355 = vstv %s354
        %v356 = vmul.f32 %v352, %v355
        %s357 = sld [smem:[#allocation8 + $0x80]]
        %v358 = vstv %s357
        %v359 = vmul.f32 %v352, %v358
        %v361 = vrot.slane %v359, 5
        %v362 = vrot.slane %v361, 4
        %v364 = vadd.f32 %v356, %v362
        %s365 = sld [smem:[#allocation8 + $0x100]]
        %v366 = vstv %s365
        %v367 = vmul.f32 %v352, %v366
        %v369 = vrot.slane %v367, 6
        %v370 = vrot.slane %v369, 4
        %v372 = vadd.f32 %v364, %v370
        %s373 = sld [smem:[#allocation8 + $0x180]]
        %v374 = vstv %s373
        %v375 = vmul.f32 %v352, %v374
        %v377 = vrot.slane %v375, 7
        %v378 = vrot.slane %v377, 4
        %v380 = vadd.f32 %v372, %v378
        %s381 = sld [smem:[#allocation9]]
        %v382 = vstv %s381
        %v383 = vadd.f32 %v380, %v382
        %v386 = vunpack.c.l.s4 1966171168
        %v387 = vunpack.c.0.s8 %v386
        %v388 = vlaneseq
        %v389 = vshrl.u32 %v388, 7
        %v390 = vsub.s32 %v387, %v389
        %v391 = vrot.slane %v383, %v390
        %v393 = vunpack.c.l.s4 1966171168
        %v394 = vunpack.c.0.s8 %v393
        %v395 = vlaneseq
        %v396 = vshrl.u32 %v395, 7
        %v397 = vsub.s32 %v394, %v396
        %v398 = vrot.slane %v391, %v397
        %v400 = vlaneseq
        %vm401 = vcmp.ge.s32.totalorder %v400, 0
        %vm402 = vcmp.lt.s32.totalorder %v400, 256
        %vm403 = vmand %vm401, %vm402
        %404 = vst.msk [vmem:[%s350] ss:$8 sm:$0x3] %vm403, %v398
        %405 = vst.msk [vmem:[%s350] ss:$8 sm:$0x0] %vm403, %v398
        %s406 = sld [smem:[#allocation8 + $0x1]]
        %v407 = vstv %s406
        %v408 = vmul.f32 %v352, %v407
        %s409 = sld [smem:[#allocation8 + $0x81]]
        %v410 = vstv %s409
        %v411 = vmul.f32 %v352, %v410
        %v413 = vrot.slane %v411, 5
        %v414 = vrot.slane %v413, 4
        %v416 = vadd.f32 %v408, %v414
        %s417 = sld [smem:[#allocation8 + $0x101]]
        %v418 = vstv %s417
        %v419 = vmul.f32 %v352, %v418
        %v421 = vrot.slane %v419, 6
        %v422 = vrot.slane %v421, 4
        %v424 = vadd.f32 %v416, %v422
        %s425 = sld [smem:[#allocation8 + $0x181]]
        %v426 = vstv %s425
        %v427 = vmul.f32 %v352, %v426
        %v429 = vrot.slane %v427, 7
        %v430 = vrot.slane %v429, 4
        %v432 = vadd.f32 %v424, %v430
        %s433 = sld [smem:[#allocation9 + $0x1]]
        %v434 = vstv %s433
        %v435 = vadd.f32 %v432, %v434
        %v438 = vunpack.c.l.s4 1966171168
        %v439 = vunpack.c.0.s8 %v438
        %v440 = vlaneseq
        %v441 = vshrl.u32 %v440, 7
        %v442 = vsub.s32 %v439, %v441
        %v443 = vrot.slane %v435, %v442
        %v445 = vunpack.c.l.s4 1966171168
        %v446 = vunpack.c.0.s8 %v445
        %v447 = vlaneseq
        %v448 = vshrl.u32 %v447, 7
        %v449 = vsub.s32 %v446, %v448
        %v450 = vrot.slane %v443, %v449
        %s452 = scalar_lea.vmem %s350, 1
        %453 = vst.msk [vmem:[%s452] ss:$8 sm:$0x3] %vm403, %v450
        %454 = vst.msk [vmem:[%s452] ss:$8 sm:$0x0] %vm403, %v450
        %s455 = sld [smem:[#allocation8 + $0x2]]
        %v456 = vstv %s455
        %v457 = vmul.f32 %v352, %v456
        %s458 = sld [smem:[#allocation8 + $0x82]]
        %v459 = vstv %s458
        %v460 = vmul.f32 %v352, %v459
        %v462 = vrot.slane %v460, 5
        %v463 = vrot.slane %v462, 4
        %v465 = vadd.f32 %v457, %v463
        %s466 = sld [smem:[#allocation8 + $0x102]]
        %v467 = vstv %s466
        %v468 = vmul.f32 %v352, %v467
        %v470 = vrot.slane %v468, 6
        %v471 = vrot.slane %v470, 4
        %v473 = vadd.f32 %v465, %v471
        %s474 = sld [smem:[#allocation8 + $0x182]]
        %v475 = vstv %s474
        %v476 = vmul.f32 %v352, %v475
        %v478 = vrot.slane %v476, 7
        %v479 = vrot.slane %v478, 4
        %v481 = vadd.f32 %v473, %v479
        %s482 = sld [smem:[#allocation9 + $0x2]]
        %v483 = vstv %s482
        %v484 = vadd.f32 %v481, %v483
        %v487 = vunpack.c.l.s4 1966171168
        %v488 = vunpack.c.0.s8 %v487
        %v489 = vlaneseq
        %v490 = vshrl.u32 %v489, 7
        %v491 = vsub.s32 %v488, %v490
        %v492 = vrot.slane %v484, %v491
        %v494 = vunpack.c.l.s4 1966171168
        %v495 = vunpack.c.0.s8 %v494
        %v496 = vlaneseq
        %v497 = vshrl.u32 %v496, 7
        %v498 = vsub.s32 %v495, %v497
        %v499 = vrot.slane %v492, %v498
        %s501 = scalar_lea.vmem %s350, 2
        %502 = vst.msk [vmem:[%s501] ss:$8 sm:$0x3] %vm403, %v499
        %503 = vst.msk [vmem:[%s501] ss:$8 sm:$0x0] %vm403, %v499
        %vm504 = vcmp.gt.f32.partialorder %v353, -1.0
        %v505 = vsel %vm504, 1, 0
        %v506 = vcvt.s32.f32 %v505
        %s507 = scalar_lea.vmem %s350, 3
        %508 = vst.msk [vmem:[%s507] ss:$8 sm:$0x3] %vm403, %v506
        %509 = vst.msk [vmem:[%s507] ss:$8 sm:$0x0] %vm403, %v506
        %s510 = smul.u32 %s29, 128
        %s511 = sld [smem:[#allocation10 + %s510]]
        %s512 = sadd.s32 %s510, 1
        %s513 = sld [smem:[#allocation10 + %s512]]
        %v514 = vstv %s511
        %v515 = vsub.f32 %v353, %v514
        %v516 = vstv %s513
        %v517 = vmul.f32 %v515, %v516
        %s518 = scalar_lea.vmem %s350, 4
        %519 = vst.msk [vmem:[%s518] ss:$8 sm:$0x3] %vm403, %v517
        %520 = vst.msk [vmem:[%s518] ss:$8 sm:$0x0] %vm403, %v517
        %s521 = smul.u32 2, %s30
        %p522 = scmp.lt.s32.totalorder %s29, 1
        %s523 = scalar_select %p522, %s29, 1
        %p524 = scmp.lt.s32.totalorder %s521, 1
        %s525 = scalar_select %p524, %s521, 1
        %s526 = smul.addr %s523, 2
        %s527 = sadd.s32 %s525, %s526
        %s528 = smul.addr %s527, 8
        %s529 = scalar_lea.vmem %s5, %s528
        // Predicated region
        $region61: #{tpu_custom_call.1} parent=39 // pred_check
          %p530 = pneg %p176
        $region62: #{tpu_custom_call.1} parent=39 // pred_check_branch
          %532 = sbr.rel (%p530) target = $region64
        $region63: #{tpu_custom_call.1} parent=39 // pred_region
          %s533 = smul.u32 2, %s30
        $region64: #{tpu_custom_call.1} parent=39 // pred_fallthru
          _
      $region40: #{tpu_custom_call.1} parent=5 // pred_fallthru
        _
      %p534 = scmp.le.s32.totalorder 2, %s20
      // Predicated region
      $region65: #{tpu_custom_call.1} parent=5 // pred_check
        %p535 = pneg %p534
      $region66: #{tpu_custom_call.1} parent=5 // pred_check_branch
        %537 = sbr.rel (%p535) target = $region68
      $region67: #{tpu_custom_call.1} parent=5 // pred_region
        %s538 = ssub.s32 %s20, 2
        // Predicated region
        $region69: #{tpu_custom_call.1} parent=67 // pred_check
          %p539 = pneg %p182
        $region70: #{tpu_custom_call.1} parent=67 // pred_check_branch
          %541 = sbr.rel (%p539) target = $region72
        $region71: #{tpu_custom_call.1} parent=67 // pred_region
          %s542 = smul.u32 2, %s32
          %p543 = scmp.lt.s32.totalorder %s31, 1
          %s544 = scalar_select %p543, %s31, 1
          %p545 = scmp.lt.s32.totalorder %s542, 1
          %s546 = scalar_select %p545, %s542, 1
          %s547 = smul.addr %s544, 2
          %s548 = sadd.s32 %s546, %s547
          %s549 = smul.addr %s548, 8
          %s550 = scalar_lea.vmem %s5, %s549
        $region72: #{tpu_custom_call.1} parent=67 // pred_fallthru
          _
      $region68: #{tpu_custom_call.1} parent=5 // pred_fallthru
        _
    $region6: #{tpu_custom_call.1} parent=1 // loop_footer
      %s24 = sadd.s32 1, %s20
    $region7: #{tpu_custom_call.1} parent=1 // loop_footer_branch
      %19 = sbr.rel target = $region3
    $region8: #{tpu_custom_call.1} parent=1 // loop_exit
      _
    %551 = vsyncpa [#allocation3], 1
    %s552 = scalar_lea.sflag [#allocation3], 1
    %553 = vsyncpa %s552, 1
    %554 = vsyncpa [#allocation7], 1
    %s555 = scalar_lea.sflag [#allocation7], 1
    %556 = vsyncpa %s555, 1
    %557 = vsyncpa [#allocation4], 1
    %s558 = scalar_lea.sflag [#allocation4], 1
    %559 = vsyncpa %s558, 1
    %560 = vsyncpa [#allocation5], 1
    %s561 = scalar_lea.sflag [#allocation5], 1
    %562 = vsyncpa %s561, 1
    %563 = vsyncpa [#allocation11], 1

</llo_original>
